<compile_context>
chip_gen: v6e
topology: v6e:2x2x1
jax: 0.10.0
libtpu: 0.0.40
codegen_flags: <defaults>
</compile_context>

<pallas_src>
import functools

import jax
import jax.numpy as jnp
from jax import lax
from jax.scipy.linalg import solve_triangular
from jax.experimental import pallas as pl
from jax.experimental.pallas import tpu as pltpu


# ---------------------------------------------------------------------------
# Helpers: per-chip VMEM budget and tile sizing
# ---------------------------------------------------------------------------
def _vmem_limit_bytes(fraction=0.75, fallback=32 * 1024 * 1024):
    """~75% of this chip's VMEM (v5e/v6e: ~96 MiB, v7x: ~48 MiB)."""
    try:
        cap = getattr(pltpu.get_tpu_info(), "vmem_capacity_bytes", None)
    except Exception:
        cap = None
    if not cap:
        return fallback
    return int(cap * fraction)


def _largest_divisor_leq(n, cap):
    cap = max(1, min(n, cap))
    for d in range(cap, 0, -1):
        if n % d == 0:
            return d
    return 1


# ---------------------------------------------------------------------------
# Kernel 1: per-class raw moments (single pass over the support tensor)
# ---------------------------------------------------------------------------
def _class_moments_kernel(x_ref, sxx_ref, sx_ref, *, tbs):
    # x_ref:   (TBs, C, hw)  chunk of one class's support set (lane-dense)
    # sxx_ref: (C, C)        resident output block: sum_i x_i x_i^T
    # sx_ref:  (C, 1)        resident output block: sum_i x_i  (tiny, once/class)
    s = pl.program_id(1)

    @pl.when(s == 0)
    def _init():
        sxx_ref[...] = jnp.zeros_like(sxx_ref)
        sx_ref[...] = jnp.zeros_like(sx_ref)

    def body(b, carry):
        xb = x_ref[b]                                     # (C, hw)
        # sum over pixels of x x^T: contract the lane (pixel) axis of both sides.
        sxx_ref[...] += lax.dot_general(
            xb, xb, (((1,), (1,)), ((), ())),
            preferred_element_type=jnp.float32,
            precision=lax.Precision.HIGHEST)              # feeds the factorization
        sx_ref[...] += jnp.sum(xb, axis=1, keepdims=True)
        return carry

    lax.fori_loop(0, tbs, body, 0, unroll=True)


def compute_class_moments(x2r, vmem_limit):
    """x2r: (n_way, Bs, C, hw) -> (Sxx (n_way,C,C), Sx (n_way,C,1)) in one pass."""
    n_way, Bs, C, hw = x2r.shape
    bytes_per_sample = C * hw * x2r.dtype.itemsize
    # Double-buffered input chunk uses at most ~1/4 of the VMEM budget; also
    # bound the in-kernel unroll length.
    tbs = _largest_divisor_leq(
        Bs, min(max(1, vmem_limit // (8 * bytes_per_sample)), 64))
    kernel = functools.partial(_class_moments_kernel, tbs=tbs)
    # TODO(synk): for v7x 2-TC balance when n_way is small, also shard the
    # Bs-chunk axis across cores (per-chunk partial sums + tiny XLA add).
    return pl.pallas_call(
        kernel,
        out_shape=(jax.ShapeDtypeStruct((n_way, C, C), jnp.float32),
                   jax.ShapeDtypeStruct((n_way, C, 1), jnp.float32)),
        grid_spec=pltpu.PrefetchScalarGridSpec(
            num_scalar_prefetch=0,
            grid=(n_way, Bs // tbs),                      # reduction axis last
            in_specs=[
                pl.BlockSpec((None, tbs, C, hw), lambda i, s: (i, s, 0, 0)),
            ],
            out_specs=(pl.BlockSpec((None, C, C), lambda i, s: (i, 0, 0)),
                       pl.BlockSpec((None, C, 1), lambda i, s: (i, 0, 0))),
        ),
        compiler_params=pltpu.CompilerParams(
            dimension_semantics=("parallel", "arbitrary"),
            vmem_limit_bytes=vmem_limit),
    )(x2r)


# ---------------------------------------------------------------------------
# Kernel 2: Mahalanobis similarity, TB queries per step, Cholesky formulation
# ---------------------------------------------------------------------------
def _mahalanobis_kernel(q_ref, a_hbm, sel_hbm, out_ref, a_vmem, sel_vmem,
                        copy_sem, *, tb):
    # q_ref:    (TB, C, HW)       query block, channels on sublanes
    # a_hbm:    (n_way*C, C)      stacked L^-1 of (cov + reg*I)
    # sel_hbm:  (n_way, n_way*C)  block-diagonal 0/1 per-class reduction matrix
    # out_ref:  (TB, n_way, HW)
    # Single-buffered constants: one VMEM copy each (vs. default double
    # buffering); the DMA overlaps the constant-free normalization below.
    cp_a = pltpu.make_async_copy(a_hbm, a_vmem, copy_sem.at[0])
    cp_sel = pltpu.make_async_copy(sel_hbm, sel_vmem, copy_sem.at[1])
    cp_a.start()
    cp_sel.start()

    q = q_ref[...]                                                   # (TB, C, HW)
    # Per-query, per-channel L2 normalization over pixels (rsqrt -> EUP slot).
    # NOTE: like the PyTorch module, an all-zero channel yields inf/NaN here.
    inv_norm = lax.rsqrt(jnp.sum(q * q, axis=2, keepdims=True))      # (TB, C, 1)
    qn = q * inv_norm
    diff = qn - jnp.mean(qn, axis=2, keepdims=True)                  # (TB, C, HW)

    cp_a.wait()
    cp_sel.wait()
    a = a_vmem[...]                                                  # (n_way*C, C)
    sel = sel_vmem[...]                                              # (n_way, n_way*C)

    def body(b, carry):
        d = lax.dynamic_index_in_dim(diff, b, axis=0, keepdims=False)  # (C, HW)
        # diag(diff^T (cov+reg*I)^-1 diff) = sum_c (L^-1 diff)_c^2 per class.
        y = jnp.dot(a, d, preferred_element_type=jnp.float32,
                    precision=lax.Precision.HIGHEST)                 # (n_way*C, HW)
        out_ref[b] = jnp.dot(sel, y * y, preferred_element_type=jnp.float32,
                             precision=lax.Precision.HIGHEST)        # (n_way, HW)
        return carry

    lax.fori_loop(0, tb, body, 0, unroll=True)


def mahalanobis_similarity(query, a_stacked, n_way, vmem_limit):
    """query: (B, C, HW) f32; a_stacked: (n_way*C, C) f32 -> (B, n_way*HW)."""
    B, C, HW = query.shape
    sel = jnp.repeat(jnp.eye(n_way, dtype=jnp.float32), C, axis=1)   # (n_way, n_way*C)
    # TB queries per grid step, sized against the VMEM budget (double-buffered
    # q/out blocks plus in-kernel temporaries) and an unroll-length cap.
    per_query = (6 * C + 2 * n_way) * HW * 4
    tb = _largest_divisor_leq(B, min(max(1, vmem_limit // (2 * per_query)), 16))
    kernel = functools.partial(_mahalanobis_kernel, tb=tb)
    out = pl.pallas_call(
        kernel,
        out_shape=jax.ShapeDtypeStruct((B, n_way, HW), jnp.float32),
        grid_spec=pltpu.PrefetchScalarGridSpec(
            num_scalar_prefetch=0,
            grid=(B // tb,),
            in_specs=[
                pl.BlockSpec((tb, C, HW), lambda b: (b, 0, 0)),
                pl.BlockSpec(memory_space=pl.ANY),   # A = stacked L^-1 (single buffer)
                pl.BlockSpec(memory_space=pl.ANY),   # sel (single buffer)
            ],
            out_specs=pl.BlockSpec((tb, n_way, HW), lambda b: (b, 0, 0)),
            scratch_shapes=[
                pltpu.VMEM((n_way * C, C), jnp.float32),
                pltpu.VMEM((n_way, n_way * C), jnp.float32),
                pltpu.SemaphoreType.DMA((2,)),
            ],
        ),
        compiler_params=pltpu.CompilerParams(
            dimension_semantics=("parallel",),
            vmem_limit_bytes=vmem_limit),
    )(query, a_stacked, sel)
    return out.reshape(B, n_way * HW)


# ---------------------------------------------------------------------------
# Full MahalanobisBlock.forward(x1, x2)
# ---------------------------------------------------------------------------
def mahalanobis_block(x1, x2, regularization=1e-6):
    """x1: (B, C, h, w) queries; x2: (n_way, B_s, C, h, w) support sets."""
    n_way, Bs, C, h, w = x2.shape
    hw = h * w
    vmem_limit = _vmem_limit_bytes()
    # Native lane-dense layout: (n_way, Bs, C, h*w) is a free reshape of NCHW.
    # (If upstream activations are bf16, drop the astype and feed bf16: the
    # kernels accumulate in f32; halving HBM bytes helps most on v5e.)
    x2r = x2.reshape(n_way, Bs, C, hw).astype(jnp.float32)
    sxx, sx = compute_class_moments(x2r, vmem_limit)       # single pass over x2
    n = Bs * hw
    mu = sx / n                                            # (n_way, C, 1)
    covs = (sxx - n * (mu * jnp.swapaxes(mu, 1, 2))) / (n - 1)   # ddof=1 (np.cov)
    # TODO(synk): the tiny batched CxC Cholesky / triangular solve has no clean
    # Pallas equivalent; it stays in plain JAX (negligible cost, and it replaces
    # torch.linalg.inv with a better-conditioned factorization).
    eye = jnp.eye(C, dtype=jnp.float32)
    chol = jnp.linalg.cholesky(covs + regularization * eye)          # (n_way, C, C)
    linv = jax.vmap(lambda m: solve_triangular(m, eye, lower=True))(chol)
    a_stacked = linv.reshape(n_way * C, C)                 # rows k*C..k*C+C-1 = L_k^-1
    B = x1.shape[0]
    query = x1.reshape(B, C, hw).astype(jnp.float32)
    return mahalanobis_similarity(query, a_stacked, n_way, vmem_limit)


# ---------------------------------------------------------------------------
# Pure-JAX reference (mirrors the PyTorch module) for a correctness check
# ---------------------------------------------------------------------------
def mahalanobis_ref(x1, x2, regularization=1e-6):
    n_way, Bs, C, h, w = x2.shape
    support = jnp.transpose(x2, (0, 1, 3, 4, 2)).reshape(n_way, Bs * h * w, C)
    xc = support - jnp.mean(support, axis=1, keepdims=True)
    covs = jnp.einsum('knc,knd->kcd', xc, xc, precision='highest') / (Bs * h * w - 1)
    inv_covs = jnp.linalg.inv(covs + regularization * jnp.eye(C, dtype=jnp.float32))
    B = x1.shape[0]
    q = x1.reshape(B, C, h * w)
    qn = q / jnp.linalg.norm(q, axis=2, keepdims=True)
    diff = qn - jnp.mean(qn, axis=2, keepdims=True)                  # (B, C, HW)
    m = jnp.einsum('kcd,bdh->bkch', inv_covs, diff, precision='highest')
    diag = jnp.sum(diff[:, None] * m, axis=2)                        # (B, n_way, HW)
    return diag.reshape(B, n_way * h * w)


if __name__ == "__main__":
    key = jax.random.PRNGKey(0)
    k1, k2 = jax.random.split(key)
    B, C, h, w = 2, 4, 16, 16          # queries
    n_way, Bs = 3, 2                   # support: 3 classes, 2 samples each
    x1 = jax.random.normal(k1, (B, C, h, w), dtype=jnp.float32)
    x2 = jax.random.normal(k2, (n_way, Bs, C, h, w), dtype=jnp.float32)

    out = jax.block_until_ready(mahalanobis_block(x1, x2))
    ref = jax.block_until_ready(mahalanobis_ref(x1, x2))

    assert out.shape == (B, n_way * h * w), out.shape
    max_err = float(jnp.max(jnp.abs(out - ref)))
    assert jnp.allclose(out, ref, atol=1e-3, rtol=1e-3), max_err
    print("KERNEL_OK")
</pallas_src>

<mosaic_0001>
module attributes {stable_mosaic.version = 11 : i64} {
  func.func @_class_moments_kernel(%arg0: i32, %arg1: i32, %arg2: memref<1x2x4x256xf32, #tpu.memory_space<vmem>>, %arg3: memref<1x4x4xf32, #tpu.memory_space<vmem>>, %arg4: memref<1x4x1xf32, #tpu.memory_space<vmem>>) attributes {dimension_semantics = [#tpu.dimension_semantics<parallel>, #tpu.dimension_semantics<arbitrary>], iteration_bounds = array<i64: 3, 1>, scalar_prefetch = 0 : i64, scratch_operands = 0 : i64, tpu.core_type = #tpu.core_type<tc>, window_params = [{transform_indices = @transform_0, window_bounds = array<i64: 1, 2, 4, 256>}, {transform_indices = @transform_1, window_bounds = array<i64: 1, 4, 4>}, {transform_indices = @transform_2, window_bounds = array<i64: 1, 4, 1>}]} {
    %c0_i32 = arith.constant 0 : i32
    %0 = arith.cmpi eq, %arg1, %c0_i32 : i32
    %1 = arith.extui %0 : i1 to i32
    %c0_i32_0 = arith.constant 0 : i32
    %2 = arith.cmpi ne, %1, %c0_i32_0 : i32
    scf.if %2 {
      %cst_34 = arith.constant 0.000000e+00 : f32
      %39 = vector.broadcast %cst_34 : f32 to vector<4x4xf32>
      %c0_35 = arith.constant 0 : index
      %c0_36 = arith.constant 0 : index
      %c0_37 = arith.constant 0 : index
      %40 = vector.load %arg3[%c0_35, %c0_36, %c0_37] : memref<1x4x4xf32, #tpu.memory_space<vmem>>, vector<1x4x4xf32>
      %41 = vector.shape_cast %40 : vector<1x4x4xf32> to vector<4x4xf32>
      %42 = vector.shape_cast %39 : vector<4x4xf32> to vector<1x4x4xf32>
      tpu.vector_store %arg3[%c0_35, %c0_36, %c0_37], %42 {strides = array<i32>} : memref<1x4x4xf32, #tpu.memory_space<vmem>>, vector<1x4x4xf32>,
      %cst_38 = arith.constant 0.000000e+00 : f32
      %43 = vector.broadcast %cst_38 : f32 to vector<4x1xf32>
      %c0_39 = arith.constant 0 : index
      %c0_40 = arith.constant 0 : index
      %c0_41 = arith.constant 0 : index
      %44 = vector.load %arg4[%c0_39, %c0_40, %c0_41] : memref<1x4x1xf32, #tpu.memory_space<vmem>>, vector<1x4x1xf32>
      %45 = vector.shape_cast %44 : vector<1x4x1xf32> to vector<4x1xf32>
      %46 = vector.shape_cast %43 : vector<4x1xf32> to vector<1x4x1xf32>
      tpu.vector_store %arg4[%c0_39, %c0_40, %c0_41], %46 {strides = array<i32>} : memref<1x4x1xf32, #tpu.memory_space<vmem>>, vector<1x4x1xf32>,
    } else {
    }
    %c0_i32_1 = arith.constant 0 : i32
    %c0 = arith.constant 0 : index
    %3 = arith.index_cast %c0_i32_1 : i32 to index
    %c0_2 = arith.constant 0 : index
    %c0_3 = arith.constant 0 : index
    %4 = vector.load %arg2[%c0, %3, %c0_2, %c0_3] : memref<1x2x4x256xf32, #tpu.memory_space<vmem>>, vector<1x1x4x256xf32>
    %5 = vector.shape_cast %4 : vector<1x1x4x256xf32> to vector<4x256xf32>
    %c0_4 = arith.constant 0 : index
    %c0_5 = arith.constant 0 : index
    %c0_6 = arith.constant 0 : index
    %6 = vector.load %arg3[%c0_4, %c0_5, %c0_6] : memref<1x4x4xf32, #tpu.memory_space<vmem>>, vector<1x4x4xf32>
    %7 = vector.shape_cast %6 : vector<1x4x4xf32> to vector<4x4xf32>
    %cst = arith.constant dense<0.000000e+00> : vector<4x4xf32>
    %8 = tpu.matmul %5, %5, %cst {dimension_numbers = #tpu.dot_dimension_numbers<[1], [1], [0], [0], [0, 0, 1, 0], [], []>, precision = #tpu.contract_precision<fp32>} : vector<4x256xf32>, vector<4x256xf32>, vector<4x4xf32> -> vector<4x4xf32>
    %9 = arith.addf %7, %8 : vector<4x4xf32>
    %c0_7 = arith.constant 0 : index
    %c0_8 = arith.constant 0 : index
    %c0_9 = arith.constant 0 : index
    %10 = vector.load %arg3[%c0_7, %c0_8, %c0_9] : memref<1x4x4xf32, #tpu.memory_space<vmem>>, vector<1x4x4xf32>
    %11 = vector.shape_cast %10 : vector<1x4x4xf32> to vector<4x4xf32>
    %12 = vector.shape_cast %9 : vector<4x4xf32> to vector<1x4x4xf32>
    tpu.vector_store %arg3[%c0_7, %c0_8, %c0_9], %12 {strides = array<i32>} : memref<1x4x4xf32, #tpu.memory_space<vmem>>, vector<1x4x4xf32>,
    %c0_10 = arith.constant 0 : index
    %c0_11 = arith.constant 0 : index
    %c0_12 = arith.constant 0 : index
    %13 = vector.load %arg4[%c0_10, %c0_11, %c0_12] : memref<1x4x1xf32, #tpu.memory_space<vmem>>, vector<1x4x1xf32>
    %14 = vector.shape_cast %13 : vector<1x4x1xf32> to vector<4x1xf32>
    %cst_13 = arith.constant dense<0.000000e+00> : vector<4xf32>
    %15 = vector.multi_reduction <add>, %5, %cst_13 [1] : vector<4x256xf32> to vector<4xf32>
    %16 = vector.shape_cast %15 : vector<4xf32> to vector<4x1xf32>
    %17 = arith.addf %14, %16 : vector<4x1xf32>
    %c0_14 = arith.constant 0 : index
    %c0_15 = arith.constant 0 : index
    %c0_16 = arith.constant 0 : index
    %18 = vector.load %arg4[%c0_14, %c0_15, %c0_16] : memref<1x4x1xf32, #tpu.memory_space<vmem>>, vector<1x4x1xf32>
    %19 = vector.shape_cast %18 : vector<1x4x1xf32> to vector<4x1xf32>
    %20 = vector.shape_cast %17 : vector<4x1xf32> to vector<1x4x1xf32>
    tpu.vector_store %arg4[%c0_14, %c0_15, %c0_16], %20 {strides = array<i32>} : memref<1x4x1xf32, #tpu.memory_space<vmem>>, vector<1x4x1xf32>,
    %c1_i32 = arith.constant 1 : i32
    %c0_17 = arith.constant 0 : index
    %21 = arith.index_cast %c1_i32 : i32 to index
    %c0_18 = arith.constant 0 : index
    %c0_19 = arith.constant 0 : index
    %22 = vector.load %arg2[%c0_17, %21, %c0_18, %c0_19] : memref<1x2x4x256xf32, #tpu.memory_space<vmem>>, vector<1x1x4x256xf32>
    %23 = vector.shape_cast %22 : vector<1x1x4x256xf32> to vector<4x256xf32>
    %c0_20 = arith.constant 0 : index
    %c0_21 = arith.constant 0 : index
    %c0_22 = arith.constant 0 : index
    %24 = vector.load %arg3[%c0_20, %c0_21, %c0_22] : memref<1x4x4xf32, #tpu.memory_space<vmem>>, vector<1x4x4xf32>
    %25 = vector.shape_cast %24 : vector<1x4x4xf32> to vector<4x4xf32>
    %cst_23 = arith.constant dense<0.000000e+00> : vector<4x4xf32>
    %26 = tpu.matmul %23, %23, %cst_23 {dimension_numbers = #tpu.dot_dimension_numbers<[1], [1], [0], [0], [0, 0, 1, 0], [], []>, precision = #tpu.contract_precision<fp32>} : vector<4x256xf32>, vector<4x256xf32>, vector<4x4xf32> -> vector<4x4xf32>
    %27 = arith.addf %25, %26 : vector<4x4xf32>
    %c0_24 = arith.constant 0 : index
    %c0_25 = arith.constant 0 : index
    %c0_26 = arith.constant 0 : index
    %28 = vector.load %arg3[%c0_24, %c0_25, %c0_26] : memref<1x4x4xf32, #tpu.memory_space<vmem>>, vector<1x4x4xf32>
    %29 = vector.shape_cast %28 : vector<1x4x4xf32> to vector<4x4xf32>
    %30 = vector.shape_cast %27 : vector<4x4xf32> to vector<1x4x4xf32>
    tpu.vector_store %arg3[%c0_24, %c0_25, %c0_26], %30 {strides = array<i32>} : memref<1x4x4xf32, #tpu.memory_space<vmem>>, vector<1x4x4xf32>,
    %c0_27 = arith.constant 0 : index
    %c0_28 = arith.constant 0 : index
    %c0_29 = arith.constant 0 : index
    %31 = vector.load %arg4[%c0_27, %c0_28, %c0_29] : memref<1x4x1xf32, #tpu.memory_space<vmem>>, vector<1x4x1xf32>
    %32 = vector.shape_cast %31 : vector<1x4x1xf32> to vector<4x1xf32>
    %cst_30 = arith.constant dense<0.000000e+00> : vector<4xf32>
    %33 = vector.multi_reduction <add>, %23, %cst_30 [1] : vector<4x256xf32> to vector<4xf32>
    %34 = vector.shape_cast %33 : vector<4xf32> to vector<4x1xf32>
    %35 = arith.addf %32, %34 : vector<4x1xf32>
    %c0_31 = arith.constant 0 : index
    %c0_32 = arith.constant 0 : index
    %c0_33 = arith.constant 0 : index
    %36 = vector.load %arg4[%c0_31, %c0_32, %c0_33] : memref<1x4x1xf32, #tpu.memory_space<vmem>>, vector<1x4x1xf32>
    %37 = vector.shape_cast %36 : vector<1x4x1xf32> to vector<4x1xf32>
    %38 = vector.shape_cast %35 : vector<4x1xf32> to vector<1x4x1xf32>
    tpu.vector_store %arg4[%c0_31, %c0_32, %c0_33], %38 {strides = array<i32>} : memref<1x4x1xf32, #tpu.memory_space<vmem>>, vector<1x4x1xf32>,
    %c2_i32 = arith.constant 2 : i32
    return
  }
  func.func @transform_0(%arg0: i32, %arg1: i32) -> (i32, i32, i32, i32) {
    %c0_i32 = arith.constant 0 : i32
    %c0_i32_0 = arith.constant 0 : i32
    %c0_i32_1 = arith.constant 0 : i32
    return %arg0, %arg1, %c0_i32, %c0_i32_0 : i32, i32, i32, i32
  }
  func.func @transform_1(%arg0: i32, %arg1: i32) -> (i32, i32, i32) {
    %c0_i32 = arith.constant 0 : i32
    %c0_i32_0 = arith.constant 0 : i32
    %c0_i32_1 = arith.constant 0 : i32
    return %arg0, %c0_i32, %c0_i32_0 : i32, i32, i32
  }
  func.func @transform_2(%arg0: i32, %arg1: i32) -> (i32, i32, i32) {
    %c0_i32 = arith.constant 0 : i32
    %c0_i32_0 = arith.constant 0 : i32
    %c0_i32_1 = arith.constant 0 : i32
    return %arg0, %c0_i32, %c0_i32_0 : i32, i32, i32
  }
}

</mosaic_0001>

<llo_original>
// kernel: tpu_custom_call.1
$region0: #{tpu_custom_call.1}
  #allocation0 [shape = 'u32[]', space=smem, size = 0x4, offset = 0x4, fixed_abs, tag = 'smem constant byte address 0x4 - core index']
  #allocation1 [shape = 'u32[144,128]{1,0:T(1,128)}', space=vmem, size = 0x12000, scoped, tag = 'internal scratch']
  %s0 = inlined_call_operand.hbm [shape: f32[3,2,4,256], index: 0, kind: input, shape index: {}]
  %s1 = inlined_call_operand.hbm [shape: f32[3,4,4], index: 1, kind: output, shape index: {0}]
  %s2 = inlined_call_operand.vmem [shape: f32[3,4,1], index: 2, kind: output, shape index: {1}]
  %3 = xla_tuple %s1, %s2
  %s4 = sld [smem:[#allocation0]]
  $region53: #{tpu_custom_call.1} parent=0
    _
  %s6 = ssub.s32 1, %s4
  %s7 = scalar_select 0, %s6, %s4
  $region1: #{tpu_custom_call.1} parent=0
    #allocation2 [shape = 'u8[16384]{0}', space=vmem, size = 0x4000, scoped, tag = 'input window, operand 0']
    #allocation3 [shape = 's32[2]{0}', space=sflag, size = 0x8, scoped, tag = 'scoped memory for tpu_custom_call.1']
    #allocation4 [shape = 's32[2]{0}', space=sflag, size = 0x8, scoped, tag = 'scoped memory for tpu_custom_call.1']
    #allocation5 [shape = 'u8[4096]{0}', space=vmem, size = 0x1000, scoped, tag = 'output window, operand 0']
    %8 = vsyncpa [#allocation3], 0
    %s9 = scalar_lea.sflag [#allocation3], 1
    %10 = vsyncpa %s9, 0
    %11 = vsyncpa [#allocation4], 0
    %s12 = scalar_lea.sflag [#allocation4], 1
    %13 = vsyncpa %s12, 0
    loop: start=0, step=1, limit=5
    $region2: #{tpu_custom_call.1} parent=1 // loop_pre_header
      _
    $region3: #{tpu_custom_call.1} parent=1 // loop_header
      %s15 = sphi 0, %s19
      %p16 = scmp.ge.s32.totalorder %s15, 5
      %s22 = sphi 0, %s34
      %s23 = sphi 0, %s30
      %s24 = sphi 0, %s22
      %s25 = sphi 0, %s23
      %s26 = sphi 0, %s24
      %s27 = sphi 0, %s25
      %s39 = sphi 0, %s41
      %s42 = sphi 0, %s39
      %s43 = sphi 0, %s42
      %s59 = sphi 0, %s43
      %s65 = sphi 0, %s67
      %s68 = sphi 0, %s65
      %s69 = sphi 0, %s68
      %s85 = sphi 0, %s69
      %s91 = sphi 0, %s93
      %s94 = sphi 0, %s91
      %s95 = sphi 0, %s94
      %s111 = sphi 0, %s95
    $region4: #{tpu_custom_call.1} parent=1 // loop_header_branch
      %18 = sbr.rel (%p16) target = $region8
    $region5: #{tpu_custom_call.1} parent=1 // loop_body
      %s20 = ssub.s32 %s15, 1
      %s21 = ssub.s32 %s15, 2
      %s28 = sadd.s32 1, %s23
      %p29 = scmp.ge.s32.totalorder %s28, 1
      %s30 = scalar_select %p29, 0, %s28
      %s31 = sadd.s32 1, %s22
      %s32 = scalar_select %p29, %s31, %s22
      %p33 = scmp.ge.s32.totalorder %s32, 3
      %s34 = scalar_select %p33, 0, %s32
      %s35 = ssub.s32 %s22, %s34
      %s36 = ssub.s32 %s23, %s30
      %s37 = sor.u32 %s35, %s36
      %p38 = scmp.eq.s32.totalorder %s37, 0
      %s40 = sadd.s32 %s39, 1
      %s41 = scalar_select %p38, %s39, %s40
      %p44 = pneg %p38
      %p45 = scmp.eq.s32.totalorder %s15, 2
      %p46 = por %p44, %p45
      %p47 = scmp.ne.s32.totalorder %s39, %s42
      %p48 = scmp.eq.s32.totalorder %s15, 0
      %p49 = por %p47, %p48
      %p50 = scmp.ne.s32.totalorder %s39, %s42
      %p51 = scmp.eq.s32.totalorder %s20, 2
      %p52 = por %p50, %p51
      %p53 = scmp.ne.s32.totalorder %s42, %s43
      %p54 = scmp.eq.s32.totalorder %s20, 0
      %p55 = por %p53, %p54
      %p56 = scmp.ne.s32.totalorder %s42, %s43
      %p57 = scmp.eq.s32.totalorder %s21, 2
      %p58 = por %p56, %p57
      %p60 = scmp.ne.s32.totalorder %s43, %s59
      %p61 = scmp.eq.s32.totalorder %s21, 0
      %p62 = por %p60, %p61
      %s63 = ssub.s32 %s22, %s34
      %p64 = scmp.eq.s32.totalorder %s63, 0
      %s66 = sadd.s32 %s65, 1
      %s67 = scalar_select %p64, %s65, %s66
      %p70 = pneg %p64
      %p71 = scmp.eq.s32.totalorder %s15, 2
      %p72 = por %p70, %p71
      %p73 = scmp.ne.s32.totalorder %s65, %s68
      %p74 = scmp.eq.s32.totalorder %s15, 0
      %p75 = por %p73, %p74
      %p76 = scmp.ne.s32.totalorder %s65, %s68
      %p77 = scmp.eq.s32.totalorder %s20, 2
      %p78 = por %p76, %p77
      %p79 = scmp.ne.s32.totalorder %s68, %s69
      %p80 = scmp.eq.s32.totalorder %s20, 0
      %p81 = por %p79, %p80
      %p82 = scmp.ne.s32.totalorder %s68, %s69
      %p83 = scmp.eq.s32.totalorder %s21, 2
      %p84 = por %p82, %p83
      %p86 = scmp.ne.s32.totalorder %s69, %s85
      %p87 = scmp.eq.s32.totalorder %s21, 0
      %p88 = por %p86, %p87
      %s89 = ssub.s32 %s22, %s34
      %p90 = scmp.eq.s32.totalorder %s89, 0
      %s92 = sadd.s32 %s91, 1
      %s93 = scalar_select %p90, %s91, %s92
      %p96 = pneg %p90
      %p97 = scmp.eq.s32.totalorder %s15, 2
      %p98 = por %p96, %p97
      %p99 = scmp.ne.s32.totalorder %s91, %s94
      %p100 = scmp.eq.s32.totalorder %s15, 0
      %p101 = por %p99, %p100
      %p102 = scmp.ne.s32.totalorder %s91, %s94
      %p103 = scmp.eq.s32.totalorder %s20, 2
      %p104 = por %p102, %p103
      %p105 = scmp.ne.s32.totalorder %s94, %s95
      %p106 = scmp.eq.s32.totalorder %s20, 0
      %p107 = por %p105, %p106
      %p108 = scmp.ne.s32.totalorder %s94, %s95
      %p109 = scmp.eq.s32.totalorder %s21, 2
      %p110 = por %p108, %p109
      %p112 = scmp.ne.s32.totalorder %s95, %s111
      %p113 = scmp.eq.s32.totalorder %s21, 0
      %p114 = por %p112, %p113
      %p115 = scmp.le.s32.totalorder 1, %s15
      %p116 = scmp.lt.s32.totalorder %s15, 4
      %p117 = pnand %p115, %p116
      %p118 = pneg %p117
      // Predicated region
      $region9: #{tpu_custom_call.1} parent=5 // pred_check
        _
      $region10: #{tpu_custom_call.1} parent=5 // pred_check_branch
        %120 = sbr.rel (%p117) target = $region12
      $region11: #{tpu_custom_call.1} parent=5 // pred_region
        %s121 = ssub.s32 %s15, 1
      $region12: #{tpu_custom_call.1} parent=5 // pred_fallthru
        _
      %p122 = scmp.lt.s32.totalorder %s15, 3
      // Predicated region
      $region13: #{tpu_custom_call.1} parent=5 // pred_check
        %p123 = pneg %p122
      $region14: #{tpu_custom_call.1} parent=5 // pred_check_branch
        %125 = sbr.rel (%p123) target = $region16
      $region15: #{tpu_custom_call.1} parent=5 // pred_region
        // Predicated region
        $region17: #{tpu_custom_call.1} parent=15 // pred_check
          %p126 = pneg %p49
        $region18: #{tpu_custom_call.1} parent=15 // pred_check_branch
          %128 = sbr.rel (%p126) target = $region20
        $region19: #{tpu_custom_call.1} parent=15 // pred_region
          %s129 = sand.u32 %s39, 1
          %s130 = scalar_lea.sflag [#allocation3], %s129
          %s131 = sand.u32 %s39, 1
          %s132 = smul.addr %s131, 16
          %s133 = scalar_lea.vmem [#allocation2], %s132
          %s134 = smul.u32 2, %s23
          %s136 = ssub.s32 256, 256
          %137 = vsyncadd %s130, %s136
          %s138 = smul.addr %s134, 2
          %s139 = smul.addr %s22, 4
          %s140 = sadd.s32 %s138, %s139
          %s141 = smul.addr %s140, 64
          %s142 = scalar_lea.hbm %s0, %s141
          %s143 = sshll.u32 %s133, 4
          %s144 = int_to_ptr.vmem [resolvable:$true] %s143
          %149 = dma.hbm_to_vmem [thread:$0]  %s142, 256, %s144, %s130, 128, 128, 8
        $region20: #{tpu_custom_call.1} parent=15 // pred_fallthru
          _
      $region16: #{tpu_custom_call.1} parent=5 // pred_fallthru
        _
      %p150 = scmp.le.s32.totalorder 1, %s15
      %p151 = scmp.lt.s32.totalorder %s15, 4
      %p152 = pnand %p150, %p151
      %p153 = pneg %p152
      // Predicated region
      $region21: #{tpu_custom_call.1} parent=5 // pred_check
        _
      $region22: #{tpu_custom_call.1} parent=5 // pred_check_branch
        %155 = sbr.rel (%p152) target = $region24
      $region23: #{tpu_custom_call.1} parent=5 // pred_region
        %s156 = ssub.s32 %s15, 1
        %s157 = sand.u32 %s42, 1
        %s158 = scalar_lea.sflag [#allocation3], %s157
        %s159 = sand.u32 %s42, 1
        %s160 = smul.addr %s159, 16
        %s161 = scalar_lea.vmem [#allocation2], %s160
        // Predicated region
        $region25: #{tpu_custom_call.1} parent=23 // pred_check
          %p162 = pneg %p55
        $region26: #{tpu_custom_call.1} parent=23 // pred_check_branch
          %164 = sbr.rel (%p162) target = $region28
        $region27: #{tpu_custom_call.1} parent=23 // pred_region
          %165 = dma.done %s158, 256
        $region28: #{tpu_custom_call.1} parent=23 // pred_fallthru
          _
        %s166 = sand.u32 %s42, 1
        %s167 = scalar_lea.sflag [#allocation3], %s166
        %s168 = sand.u32 %s42, 1
        %s169 = smul.addr %s168, 16
        %s170 = scalar_lea.vmem [#allocation2], %s169
        %p171 = pneg %p55
        %p172 = pneg %p52
        %p173 = pneg %p81
        %p174 = pneg %p78
        %s175 = sand.u32 %s68, 1
        %s176 = scalar_lea.sflag [#allocation4], %s175
        %s177 = sand.u32 %s68, 1
        %s178 = smul.addr %s177, 4
        %s179 = scalar_lea.vmem [#allocation5], %s178
        %p180 = pneg %p107
        %p181 = pneg %p104
        %p182 = scmp.lt.s32.totalorder %s24, 2
        %s183 = scalar_select %p182, %s24, 2
        %s184 = smul.addr %s183, 4
        %s185 = scalar_lea.vmem %s2, %s184
        %s186 = smul.u32 2, %s25
        %p187 = scmp.lt.s32.totalorder %s24, 2
        %s188 = scalar_select %p187, %s24, 2
        %s189 = smul.addr %s188, 4
        %s190 = scalar_lea.vmem %s2, %s189
        %p191 = scmp.eq.s32.totalorder %s25, 0
        // Predicated region
        $region29: #{tpu_custom_call.1} parent=23 // pred_check
          %p192 = pneg %p191
        $region30: #{tpu_custom_call.1} parent=23 // pred_check_branch
          %194 = sbr.rel (%p192) target = $region32
        $region31: #{tpu_custom_call.1} parent=23 // pred_region
          %vm195 = vcmask 27648
          %196 = vst.msk [vmem:[%s179] sm:$0xf] %vm195, 0.0
          %vm197 = vcmask 3072
          %198 = vst.msk [vmem:[%s190] sm:$0xf] %vm197, 0.0
        $region32: #{tpu_custom_call.1} parent=23 // pred_fallthru
          _
        %v199 = vld [vmem:[%s161] sm:$0xff]
        %v200 = vld [vmem:[%s179] sm:$0xf]
        %v202 = vcombine.high %v199, %v199
        %204 = vmatprep.subr.mxu0 0.0
        %205 = vmatpush1.xpose.msra.mxu0 0.0
        %206 = vmatprep.subr.mxu0 0.0
        %207 = vmatpush1.xpose.msra.mxu0 0.0
        %208 = vmatprep.subr.mxu0 0.0
        %209 = vmatpush1.xpose.msra.mxu0 0.0
        %210 = vmatprep.subr.mxu0 0.0
        %211 = vmatpush1.xpose.msra.mxu0 0.0
        %212 = vmatprep.subr.mxu0 0.0
        %213 = vmatpush1.xpose.msra.mxu0 0.0
        %214 = vmatprep.subr.mxu0 0.0
        %215 = vmatpush1.xpose.msra.mxu0 0.0
        %216 = vmatprep.subr.mxu0 0.0
        %217 = vmatpush1.xpose.msra.mxu0 0.0
        %218 = vmatprep.subr.mxu0 0.0
        %219 = vmatpush1.xpose.msra.mxu0 0.0
        %220 = vmatprep.subr.mxu0 0.0
        %221 = vmatpush1.xpose.msra.mxu0 0.0
        %222 = vmatprep.subr.mxu0 0.0
        %223 = vmatpush1.xpose.msra.mxu0 0.0
        %224 = vmatprep.subr.mxu0 0.0
        %225 = vmatpush1.xpose.msra.mxu0 0.0
        %226 = vmatprep.subr.mxu0 0.0
        %227 = vmatpush1.xpose.msra.mxu0 0.0
        %228 = vmatprep.subr.mxu0 0.0
        %229 = vmatpush1.xpose.msra.mxu0 0.0
        %230 = vmatprep.subr.mxu0 0.0
        %231 = vmatpush1.xpose.msra.mxu0 0.0
        %232 = vmatprep.subr.mxu0 0.0
        %233 = vmatpush1.xpose.msra.mxu0 0.0
        %v234 = vand.u32 %v202, 4294901760
        %235 = vmatprep.subr.mxu0 %v234
        %v236 = vand.u32 %v199, 4294901760
        %237 = vmatpush1.xpose.msra.mxu0 %v236
        %238 = vmatprep.subr.mxu0 0.0
        %239 = vmatpush2.xpose.msra.mxu0 0.0
        %240 = vmatprep.subr.mxu0 0.0
        %241 = vmatpush2.xpose.msra.mxu0 0.0
        %242 = vmatprep.subr.mxu0 0.0
        %243 = vmatpush2.xpose.msra.mxu0 0.0
        %244 = vmatprep.subr.mxu0 0.0
        %245 = vmatpush2.xpose.msra.mxu0 0.0
        %246 = vmatprep.subr.mxu0 0.0
        %247 = vmatpush2.xpose.msra.mxu0 0.0
        %248 = vmatprep.subr.mxu0 0.0
        %249 = vmatpush2.xpose.msra.mxu0 0.0
        %250 = vmatprep.subr.mxu0 0.0
        %251 = vmatpush2.xpose.msra.mxu0 0.0
        %252 = vmatprep.subr.mxu0 0.0
        %253 = vmatpush2.xpose.msra.mxu0 0.0
        %254 = vmatprep.subr.mxu0 0.0
        %255 = vmatpush2.xpose.msra.mxu0 0.0
        %256 = vmatprep.subr.mxu0 0.0
        %257 = vmatpush2.xpose.msra.mxu0 0.0
        %258 = vmatprep.subr.mxu0 0.0
        %259 = vmatpush2.xpose.msra.mxu0 0.0
        %260 = vmatprep.subr.mxu0 0.0
        %261 = vmatpush2.xpose.msra.mxu0 0.0
        %262 = vmatprep.subr.mxu0 0.0
        %263 = vmatpush2.xpose.msra.mxu0 0.0
        %264 = vmatprep.subr.mxu0 0.0
        %265 = vmatpush2.xpose.msra.mxu0 0.0
        %266 = vmatprep.subr.mxu0 0.0
        %267 = vmatpush2.xpose.msra.mxu0 0.0
        %268 = vmatprep.subr.mxu0 0.0
        %269 = vmatpush2.xpose.msra.mxu0 0.0
        %v270 = vand.u32 %v202, 4294901760
        %v271 = vsub.f32 %v202, %v270
        %v272 = vand.u32 %v271, 4294901760
        %v273 = vsub.f32 %v271, %v272
        %v274 = vand.u32 %v273, 4294901760
        %275 = vmatprep.mubr.f32.mxu0 %v274
        %v276 = vand.u32 %v199, 4294901760
        %v277 = vsub.f32 %v199, %v276
        %v278 = vand.u32 %v277, 4294901760
        %v279 = vsub.f32 %v277, %v278
        %v280 = vand.u32 %v279, 4294901760
        %281 = vmatmul.mubr.f32.gmra.mxu0 %v280
        %v282 = vpop.f32.mrf.mxu0
        %v283 = vadd.f32 0.0, %v282
        %v284 = vpop.f32.mrf.mxu0
        %285 = vdwg.mxu0
        %286 = vmatprep.subr.mxu0 0.0
        %287 = vmatpush1.xpose.msra.mxu0 0.0
        %288 = vmatprep.subr.mxu0 0.0
        %289 = vmatpush1.xpose.msra.mxu0 0.0
        %290 = vmatprep.subr.mxu0 0.0
        %291 = vmatpush1.xpose.msra.mxu0 0.0
        %292 = vmatprep.subr.mxu0 0.0
        %293 = vmatpush1.xpose.msra.mxu0 0.0
        %294 = vmatprep.subr.mxu0 0.0
        %295 = vmatpush1.xpose.msra.mxu0 0.0
        %296 = vmatprep.subr.mxu0 0.0
        %297 = vmatpush1.xpose.msra.mxu0 0.0
        %298 = vmatprep.subr.mxu0 0.0
        %299 = vmatpush1.xpose.msra.mxu0 0.0
        %300 = vmatprep.subr.mxu0 0.0
        %301 = vmatpush1.xpose.msra.mxu0 0.0
        %302 = vmatprep.subr.mxu0 0.0
        %303 = vmatpush1.xpose.msra.mxu0 0.0
        %304 = vmatprep.subr.mxu0 0.0
        %305 = vmatpush1.xpose.msra.mxu0 0.0
        %306 = vmatprep.subr.mxu0 0.0
        %307 = vmatpush1.xpose.msra.mxu0 0.0
        %308 = vmatprep.subr.mxu0 0.0
        %309 = vmatpush1.xpose.msra.mxu0 0.0
        %310 = vmatprep.subr.mxu0 0.0
        %311 = vmatpush1.xpose.msra.mxu0 0.0
        %312 = vmatprep.subr.mxu0 0.0
        %313 = vmatpush1.xpose.msra.mxu0 0.0
        %314 = vmatprep.subr.mxu0 0.0
        %315 = vmatpush1.xpose.msra.mxu0 0.0
        %v316 = vand.u32 %v202, 4294901760
        %v317 = vsub.f32 %v202, %v316
        %v318 = vand.u32 %v317, 4294901760
        %v319 = vsub.f32 %v317, %v318
        %v320 = vand.u32 %v319, 4294901760
        %321 = vmatprep.subr.mxu0 %v320
        %v322 = vand.u32 %v199, 4294901760
        %v323 = vsub.f32 %v199, %v322
        %v324 = vand.u32 %v323, 4294901760
        %v325 = vsub.f32 %v323, %v324
        %v326 = vand.u32 %v325, 4294901760
        %327 = vmatpush1.xpose.msra.mxu0 %v326
        %328 = vmatprep.subr.mxu0 0.0
        %329 = vmatpush2.xpose.msra.mxu0 0.0
        %330 = vmatprep.subr.mxu0 0.0
        %331 = vmatpush2.xpose.msra.mxu0 0.0
        %332 = vmatprep.subr.mxu0 0.0
        %333 = vmatpush2.xpose.msra.mxu0 0.0
        %334 = vmatprep.subr.mxu0 0.0
        %335 = vmatpush2.xpose.msra.mxu0 0.0
        %336 = vmatprep.subr.mxu0 0.0
        %337 = vmatpush2.xpose.msra.mxu0 0.0
        %338 = vmatprep.subr.mxu0 0.0
        %339 = vmatpush2.xpose.msra.mxu0 0.0
        %340 = vmatprep.subr.mxu0 0.0
        %341 = vmatpush2.xpose.msra.mxu0 0.0
        %342 = vmatprep.subr.mxu0 0.0
        %343 = vmatpush2.xpose.msra.mxu0 0.0
        %344 = vmatprep.subr.mxu0 0.0
        %345 = vmatpush2.xpose.msra.mxu0 0.0
        %346 = vmatprep.subr.mxu0 0.0
        %347 = vmatpush2.xpose.msra.mxu0 0.0
        %348 = vmatprep.subr.mxu0 0.0
        %349 = vmatpush2.xpose.msra.mxu0 0.0
        %350 = vmatprep.subr.mxu0 0.0
        %351 = vmatpush2.xpose.msra.mxu0 0.0
        %352 = vmatprep.subr.mxu0 0.0
        %353 = vmatpush2.xpose.msra.mxu0 0.0
        %354 = vmatprep.subr.mxu0 0.0
        %355 = vmatpush2.xpose.msra.mxu0 0.0
        %356 = vmatprep.subr.mxu0 0.0
        %357 = vmatpush2.xpose.msra.mxu0 0.0
        %358 = vmatprep.subr.mxu0 0.0
        %359 = vmatpush2.xpose.msra.mxu0 0.0
        %v360 = vand.u32 %v202, 4294901760
        %361 = vmatprep.mubr.f32.mxu0 %v360
        %v362 = vand.u32 %v199, 4294901760
        %363 = vmatmul.mubr.f32.gmra.mxu0 %v362
        %v364 = vpop.f32.mrf.mxu0
        %v365 = vadd.f32 %v283, %v364
        %v366 = vpop.f32.mrf.mxu0
        %367 = vdwg.mxu0
        %368 = vmatprep.subr.mxu0 0.0
        %369 = vmatpush1.xpose.msra.mxu0 0.0
        %370 = vmatprep.subr.mxu0 0.0
        %371 = vmatpush1.xpose.msra.mxu0 0.0
        %372 = vmatprep.subr.mxu0 0.0
        %373 = vmatpush1.xpose.msra.mxu0 0.0
        %374 = vmatprep.subr.mxu0 0.0
        %375 = vmatpush1.xpose.msra.mxu0 0.0
        %376 = vmatprep.subr.mxu0 0.0
        %377 = vmatpush1.xpose.msra.mxu0 0.0
        %378 = vmatprep.subr.mxu0 0.0
        %379 = vmatpush1.xpose.msra.mxu0 0.0
        %380 = vmatprep.subr.mxu0 0.0
        %381 = vmatpush1.xpose.msra.mxu0 0.0
        %382 = vmatprep.subr.mxu0 0.0
        %383 = vmatpush1.xpose.msra.mxu0 0.0
        %384 = vmatprep.subr.mxu0 0.0
        %385 = vmatpush1.xpose.msra.mxu0 0.0
        %386 = vmatprep.subr.mxu0 0.0
        %387 = vmatpush1.xpose.msra.mxu0 0.0
        %388 = vmatprep.subr.mxu0 0.0
        %389 = vmatpush1.xpose.msra.mxu0 0.0
        %390 = vmatprep.subr.mxu0 0.0
        %391 = vmatpush1.xpose.msra.mxu0 0.0
        %392 = vmatprep.subr.mxu0 0.0
        %393 = vmatpush1.xpose.msra.mxu0 0.0
        %394 = vmatprep.subr.mxu0 0.0
        %395 = vmatpush1.xpose.msra.mxu0 0.0
        %396 = vmatprep.subr.mxu0 0.0
        %397 = vmatpush1.xpose.msra.mxu0 0.0
        %v398 = vand.u32 %v202, 4294901760
        %v399 = vsub.f32 %v202, %v398
        %400 = vmatprep.subr.mxu0 %v399
        %v401 = vand.u32 %v199, 4294901760
        %v402 = vsub.f32 %v199, %v401
        %403 = vmatpush1.xpose.msra.mxu0 %v402
        %404 = vmatprep.subr.mxu0 0.0
        %405 = vmatpush2.xpose.msra.mxu0 0.0
        %406 = vmatprep.subr.mxu0 0.0
        %407 = vmatpush2.xpose.msra.mxu0 0.0
        %408 = vmatprep.subr.mxu0 0.0
        %409 = vmatpush2.xpose.msra.mxu0 0.0
        %410 = vmatprep.subr.mxu0 0.0
        %411 = vmatpush2.xpose.msra.mxu0 0.0
        %412 = vmatprep.subr.mxu0 0.0
        %413 = vmatpush2.xpose.msra.mxu0 0.0
        %414 = vmatprep.subr.mxu0 0.0
        %415 = vmatpush2.xpose.msra.mxu0 0.0
        %416 = vmatprep.subr.mxu0 0.0
        %417 = vmatpush2.xpose.msra.mxu0 0.0
        %418 = vmatprep.subr.mxu0 0.0
        %419 = vmatpush2.xpose.msra.mxu0 0.0
        %420 = vmatprep.subr.mxu0 0.0
        %421 = vmatpush2.xpose.msra.mxu0 0.0
        %422 = vmatprep.subr.mxu0 0.0
        %423 = vmatpush2.xpose.msra.mxu0 0.0
        %424 = vmatprep.subr.mxu0 0.0
        %425 = vmatpush2.xpose.msra.mxu0 0.0
        %426 = vmatprep.subr.mxu0 0.0
        %427 = vmatpush2.xpose.msra.mxu0 0.0
        %428 = vmatprep.subr.mxu0 0.0
        %429 = vmatpush2.xpose.msra.mxu0 0.0
        %430 = vmatprep.subr.mxu0 0.0
        %431 = vmatpush2.xpose.msra.mxu0 0.0
        %432 = vmatprep.subr.mxu0 0.0
        %433 = vmatpush2.xpose.msra.mxu0 0.0
        %434 = vmatprep.subr.mxu0 0.0
        %435 = vmatpush2.xpose.msra.mxu0 0.0
        %v436 = vand.u32 %v202, 4294901760
        %v437 = vsub.f32 %v202, %v436
        %438 = vmatprep.mubr.f32.mxu0 %v437
        %v439 = vand.u32 %v199, 4294901760
        %v440 = vsub.f32 %v199, %v439
        %441 = vmatmul.mubr.f32.gmra.mxu0 %v440
        %v442 = vpop.f32.mrf.mxu0
        %v443 = vadd.f32 %v365, %v442
        %v444 = vpop.f32.mrf.mxu0
        %445 = vdwg.mxu0
        %446 = vmatprep.subr.mxu0 0.0
        %447 = vmatpush1.xpose.msra.mxu0 0.0
        %448 = vmatprep.subr.mxu0 0.0
        %449 = vmatpush1.xpose.msra.mxu0 0.0
        %450 = vmatprep.subr.mxu0 0.0
        %451 = vmatpush1.xpose.msra.mxu0 0.0
        %452 = vmatprep.subr.mxu0 0.0
        %453 = vmatpush1.xpose.msra.mxu0 0.0
        %454 = vmatprep.subr.mxu0 0.0
        %455 = vmatpush1.xpose.msra.mxu0 0.0
        %456 = vmatprep.subr.mxu0 0.0
        %457 = vmatpush1.xpose.msra.mxu0 0.0
        %458 = vmatprep.subr.mxu0 0.0
        %459 = vmatpush1.xpose.msra.mxu0 0.0
        %460 = vmatprep.subr.mxu0 0.0
        %461 = vmatpush1.xpose.msra.mxu0 0.0
        %462 = vmatprep.subr.mxu0 0.0
        %463 = vmatpush1.xpose.msra.mxu0 0.0
        %464 = vmatprep.subr.mxu0 0.0
        %465 = vmatpush1.xpose.msra.mxu0 0.0
        %466 = vmatprep.subr.mxu0 0.0
        %467 = vmatpush1.xpose.msra.mxu0 0.0
        %468 = vmatprep.subr.mxu0 0.0
        %469 = vmatpush1.xpose.msra.mxu0 0.0
        %470 = vmatprep.subr.mxu0 0.0
        %471 = vmatpush1.xpose.msra.mxu0 0.0
        %472 = vmatprep.subr.mxu0 0.0
        %473 = vmatpush1.xpose.msra.mxu0 0.0
        %474 = vmatprep.subr.mxu0 0.0
        %475 = vmatpush1.xpose.msra.mxu0 0.0
        %v476 = vand.u32 %v202, 4294901760
        %477 = vmatprep.subr.mxu0 %v476
        %v478 = vand.u32 %v199, 4294901760
        %479 = vmatpush1.xpose.msra.mxu0 %v478
        %480 = vmatprep.subr.mxu0 0.0
        %481 = vmatpush2.xpose.msra.mxu0 0.0
        %482 = vmatprep.subr.mxu0 0.0
        %483 = vmatpush2.xpose.msra.mxu0 0.0
        %484 = vmatprep.subr.mxu0 0.0
        %485 = vmatpush2.xpose.msra.mxu0 0.0
        %486 = vmatprep.subr.mxu0 0.0
        %487 = vmatpush2.xpose.msra.mxu0 0.0
        %488 = vmatprep.subr.mxu0 0.0
        %489 = vmatpush2.xpose.msra.mxu0 0.0
        %490 = vmatprep.subr.mxu0 0.0
        %491 = vmatpush2.xpose.msra.mxu0 0.0
        %492 = vmatprep.subr.mxu0 0.0
        %493 = vmatpush2.xpose.msra.mxu0 0.0
        %494 = vmatprep.subr.mxu0 0.0
        %495 = vmatpush2.xpose.msra.mxu0 0.0
        %496 = vmatprep.subr.mxu0 0.0
        %497 = vmatpush2.xpose.msra.mxu0 0.0
        %498 = vmatprep.subr.mxu0 0.0
        %499 = vmatpush2.xpose.msra.mxu0 0.0
        %500 = vmatprep.subr.mxu0 0.0
        %501 = vmatpush2.xpose.msra.mxu0 0.0
        %502 = vmatprep.subr.mxu0 0.0
        %503 = vmatpush2.xpose.msra.mxu0 0.0
        %504 = vmatprep.subr.mxu0 0.0
        %505 = vmatpush2.xpose.msra.mxu0 0.0
        %506 = vmatprep.subr.mxu0 0.0
        %507 = vmatpush2.xpose.msra.mxu0 0.0
        %508 = vmatprep.subr.mxu0 0.0
        %509 = vmatpush2.xpose.msra.mxu0 0.0
        %510 = vmatprep.subr.mxu0 0.0
        %511 = vmatpush2.xpose.msra.mxu0 0.0
        %v512 = vand.u32 %v202, 4294901760
        %v513 = vsub.f32 %v202, %v512
        %v514 = vand.u32 %v513, 4294901760
        %515 = vmatprep.mubr.f32.mxu0 %v514
        %v516 = vand.u32 %v199, 4294901760
        %v517 = vsub.f32 %v199, %v516
        %v518 = vand.u32 %v517, 4294901760
        %519 = vmatmul.mubr.f32.gmra.mxu0 %v518
        %v520 = vpop.f32.mrf.mxu0
        %v521 = vadd.f32 %v443, %v520
        %v522 = vpop.f32.mrf.mxu0
        %523 = vdwg.mxu0
        %524 = vmatprep.subr.mxu0 0.0
        %525 = vmatpush1.xpose.msra.mxu0 0.0
        %526 = vmatprep.subr.mxu0 0.0
        %527 = vmatpush1.xpose.msra.mxu0 0.0
        %528 = vmatprep.subr.mxu0 0.0
        %529 = vmatpush1.xpose.msra.mxu0 0.0
        %530 = vmatprep.subr.mxu0 0.0
        %531 = vmatpush1.xpose.msra.mxu0 0.0
        %532 = vmatprep.subr.mxu0 0.0
        %533 = vmatpush1.xpose.msra.mxu0 0.0
        %534 = vmatprep.subr.mxu0 0.0
        %535 = vmatpush1.xpose.msra.mxu0 0.0
        %536 = vmatprep.subr.mxu0 0.0
        %537 = vmatpush1.xpose.msra.mxu0 0.0
        %538 = vmatprep.subr.mxu0 0.0
        %539 = vmatpush1.xpose.msra.mxu0 0.0
        %540 = vmatprep.subr.mxu0 0.0
        %541 = vmatpush1.xpose.msra.mxu0 0.0
        %542 = vmatprep.subr.mxu0 0.0
        %543 = vmatpush1.xpose.msra.mxu0 0.0
        %544 = vmatprep.subr.mxu0 0.0
        %545 = vmatpush1.xpose.msra.mxu0 0.0
        %546 = vmatprep.subr.mxu0 0.0
        %547 = vmatpush1.xpose.msra.mxu0 0.0
        %548 = vmatprep.subr.mxu0 0.0
        %549 = vmatpush1.xpose.msra.mxu0 0.0
        %550 = vmatprep.subr.mxu0 0.0
        %551 = vmatpush1.xpose.msra.mxu0 0.0
        %552 = vmatprep.subr.mxu0 0.0
        %553 = vmatpush1.xpose.msra.mxu0 0.0
        %v554 = vand.u32 %v202, 4294901760
        %v555 = vsub.f32 %v202, %v554
        %v556 = vand.u32 %v555, 4294901760
        %557 = vmatprep.subr.mxu0 %v556
        %v558 = vand.u32 %v199, 4294901760
        %v559 = vsub.f32 %v199, %v558
        %v560 = vand.u32 %v559, 4294901760
        %561 = vmatpush1.xpose.msra.mxu0 %v560
        %562 = vmatprep.subr.mxu0 0.0
        %563 = vmatpush2.xpose.msra.mxu0 0.0
        %564 = vmatprep.subr.mxu0 0.0
        %565 = vmatpush2.xpose.msra.mxu0 0.0
        %566 = vmatprep.subr.mxu0 0.0
        %567 = vmatpush2.xpose.msra.mxu0 0.0
        %568 = vmatprep.subr.mxu0 0.0
        %569 = vmatpush2.xpose.msra.mxu0 0.0
        %570 = vmatprep.subr.mxu0 0.0
        %571 = vmatpush2.xpose.msra.mxu0 0.0
        %572 = vmatprep.subr.mxu0 0.0
        %573 = vmatpush2.xpose.msra.mxu0 0.0
        %574 = vmatprep.subr.mxu0 0.0
        %575 = vmatpush2.xpose.msra.mxu0 0.0
        %576 = vmatprep.subr.mxu0 0.0
        %577 = vmatpush2.xpose.msra.mxu0 0.0
        %578 = vmatprep.subr.mxu0 0.0
        %579 = vmatpush2.xpose.msra.mxu0 0.0
        %580 = vmatprep.subr.mxu0 0.0
        %581 = vmatpush2.xpose.msra.mxu0 0.0
        %582 = vmatprep.subr.mxu0 0.0
        %583 = vmatpush2.xpose.msra.mxu0 0.0
        %584 = vmatprep.subr.mxu0 0.0
        %585 = vmatpush2.xpose.msra.mxu0 0.0
        %586 = vmatprep.subr.mxu0 0.0
        %587 = vmatpush2.xpose.msra.mxu0 0.0
        %588 = vmatprep.subr.mxu0 0.0
        %589 = vmatpush2.xpose.msra.mxu0 0.0
        %590 = vmatprep.subr.mxu0 0.0
        %591 = vmatpush2.xpose.msra.mxu0 0.0
        %592 = vmatprep.subr.mxu0 0.0
        %593 = vmatpush2.xpose.msra.mxu0 0.0
        %v594 = vand.u32 %v202, 4294901760
        %595 = vmatprep.mubr.f32.mxu0 %v594
        %v596 = vand.u32 %v199, 4294901760
        %597 = vmatmul.mubr.f32.gmra.mxu0 %v596
        %v598 = vpop.f32.mrf.mxu0
        %v599 = vadd.f32 %v521, %v598
        %v600 = vpop.f32.mrf.mxu0
        %601 = vdwg.mxu0
        %602 = vmatprep.subr.mxu0 0.0
        %603 = vmatpush1.xpose.msra.mxu0 0.0
        %604 = vmatprep.subr.mxu0 0.0
        %605 = vmatpush1.xpose.msra.mxu0 0.0
        %606 = vmatprep.subr.mxu0 0.0
        %607 = vmatpush1.xpose.msra.mxu0 0.0
        %608 = vmatprep.subr.mxu0 0.0
        %609 = vmatpush1.xpose.msra.mxu0 0.0
        %610 = vmatprep.subr.mxu0 0.0
        %611 = vmatpush1.xpose.msra.mxu0 0.0
        %612 = vmatprep.subr.mxu0 0.0
        %613 = vmatpush1.xpose.msra.mxu0 0.0
        %614 = vmatprep.subr.mxu0 0.0
        %615 = vmatpush1.xpose.msra.mxu0 0.0
        %616 = vmatprep.subr.mxu0 0.0
        %617 = vmatpush1.xpose.msra.mxu0 0.0
        %618 = vmatprep.subr.mxu0 0.0
        %619 = vmatpush1.xpose.msra.mxu0 0.0
        %620 = vmatprep.subr.mxu0 0.0
        %621 = vmatpush1.xpose.msra.mxu0 0.0
        %622 = vmatprep.subr.mxu0 0.0
        %623 = vmatpush1.xpose.msra.mxu0 0.0
        %624 = vmatprep.subr.mxu0 0.0
        %625 = vmatpush1.xpose.msra.mxu0 0.0
        %626 = vmatprep.subr.mxu0 0.0
        %627 = vmatpush1.xpose.msra.mxu0 0.0
        %628 = vmatprep.subr.mxu0 0.0
        %629 = vmatpush1.xpose.msra.mxu0 0.0
        %630 = vmatprep.subr.mxu0 0.0
        %631 = vmatpush1.xpose.msra.mxu0 0.0
        %v632 = vand.u32 %v202, 4294901760
        %633 = vmatprep.subr.mxu0 %v632
        %v634 = vand.u32 %v199, 4294901760
        %635 = vmatpush1.xpose.msra.mxu0 %v634
        %636 = vmatprep.subr.mxu0 0.0
        %637 = vmatpush2.xpose.msra.mxu0 0.0
        %638 = vmatprep.subr.mxu0 0.0
        %639 = vmatpush2.xpose.msra.mxu0 0.0
        %640 = vmatprep.subr.mxu0 0.0
        %641 = vmatpush2.xpose.msra.mxu0 0.0
        %642 = vmatprep.subr.mxu0 0.0
        %643 = vmatpush2.xpose.msra.mxu0 0.0
        %644 = vmatprep.subr.mxu0 0.0
        %645 = vmatpush2.xpose.msra.mxu0 0.0
        %646 = vmatprep.subr.mxu0 0.0
        %647 = vmatpush2.xpose.msra.mxu0 0.0
        %648 = vmatprep.subr.mxu0 0.0
        %649 = vmatpush2.xpose.msra.mxu0 0.0
        %650 = vmatprep.subr.mxu0 0.0
        %651 = vmatpush2.xpose.msra.mxu0 0.0
        %652 = vmatprep.subr.mxu0 0.0
        %653 = vmatpush2.xpose.msra.mxu0 0.0
        %654 = vmatprep.subr.mxu0 0.0
        %655 = vmatpush2.xpose.msra.mxu0 0.0
        %656 = vmatprep.subr.mxu0 0.0
        %657 = vmatpush2.xpose.msra.mxu0 0.0
        %658 = vmatprep.subr.mxu0 0.0
        %659 = vmatpush2.xpose.msra.mxu0 0.0
        %660 = vmatprep.subr.mxu0 0.0
        %661 = vmatpush2.xpose.msra.mxu0 0.0
        %662 = vmatprep.subr.mxu0 0.0
        %663 = vmatpush2.xpose.msra.mxu0 0.0
        %664 = vmatprep.subr.mxu0 0.0
        %665 = vmatpush2.xpose.msra.mxu0 0.0
        %666 = vmatprep.subr.mxu0 0.0
        %667 = vmatpush2.xpose.msra.mxu0 0.0
        %v668 = vand.u32 %v202, 4294901760
        %669 = vmatprep.mubr.f32.mxu0 %v668
        %v670 = vand.u32 %v199, 4294901760
        %671 = vmatmul.mubr.f32.gmra.mxu0 %v670
        %v672 = vpop.f32.mrf.mxu0
        %v673 = vadd.f32 %v599, %v672
        %v674 = vpop.f32.mrf.mxu0
        %675 = vdwg.mxu0
        %v676 = vadd.f32 %v200, %v673
        %vm677 = vcmask 27648
        %678 = vst.msk [vmem:[%s179] sm:$0xf] %vm677, %v676
        %v679 = vld [vmem:[%s190] sm:$0xf]
        %vm680 = vcmask 1043456
        %v681 = vsel %vm680, %v199, 0.0
        %v682 = vsel %vm680, %v202, 0.0
        %v683 = vadd.f32 %v681, %v682
        %684 = vadd.xlane.f32.xlu0 %v683
        %v685 = vpop.xlane.xlu0 %684
        %v686 = vadd.f32 %v679, %v685
        %vm687 = vcmask 3072
        %688 = vst.msk [vmem:[%s190] sm:$0xf] %vm687, %v686
        %s689 = scalar_lea.vmem %s161, 8 [#allocation2]
        %v690 = vld [vmem:[%s689] sm:$0xff]
        %v691 = vld [vmem:[%s179] sm:$0xf]
        %v693 = vcombine.high %v690, %v690
        %695 = vmatprep.subr.mxu0 0.0
        %696 = vmatpush1.xpose.msra.mxu0 0.0
        %697 = vmatprep.subr.mxu0 0.0
        %698 = vmatpush1.xpose.msra.mxu0 0.0
        %699 = vmatprep.subr.mxu0 0.0
        %700 = vmatpush1.xpose.msra.mxu0 0.0
        %701 = vmatprep.subr.mxu0 0.0
        %702 = vmatpush1.xpose.msra.mxu0 0.0
        %703 = vmatprep.subr.mxu0 0.0
        %704 = vmatpush1.xpose.msra.mxu0 0.0
        %705 = vmatprep.subr.mxu0 0.0
        %706 = vmatpush1.xpose.msra.mxu0 0.0
        %707 = vmatprep.subr.mxu0 0.0
        %708 = vmatpush1.xpose.msra.mxu0 0.0
        %709 = vmatprep.subr.mxu0 0.0
        %710 = vmatpush1.xpose.msra.mxu0 0.0
        %711 = vmatprep.subr.mxu0 0.0
        %712 = vmatpush1.xpose.msra.mxu0 0.0
        %713 = vmatprep.subr.mxu0 0.0
        %714 = vmatpush1.xpose.msra.mxu0 0.0
        %715 = vmatprep.subr.mxu0 0.0
        %716 = vmatpush1.xpose.msra.mxu0 0.0
        %717 = vmatprep.subr.mxu0 0.0
        %718 = vmatpush1.xpose.msra.mxu0 0.0
        %719 = vmatprep.subr.mxu0 0.0
        %720 = vmatpush1.xpose.msra.mxu0 0.0
        %721 = vmatprep.subr.mxu0 0.0
        %722 = vmatpush1.xpose.msra.mxu0 0.0
        %723 = vmatprep.subr.mxu0 0.0
        %724 = vmatpush1.xpose.msra.mxu0 0.0
        %v725 = vand.u32 %v693, 4294901760
        %726 = vmatprep.subr.mxu0 %v725
        %v727 = vand.u32 %v690, 4294901760
        %728 = vmatpush1.xpose.msra.mxu0 %v727
        %729 = vmatprep.subr.mxu0 0.0
        %730 = vmatpush2.xpose.msra.mxu0 0.0
        %731 = vmatprep.subr.mxu0 0.0
        %732 = vmatpush2.xpose.msra.mxu0 0.0
        %733 = vmatprep.subr.mxu0 0.0
        %734 = vmatpush2.xpose.msra.mxu0 0.0
        %735 = vmatprep.subr.mxu0 0.0
        %736 = vmatpush2.xpose.msra.mxu0 0.0
        %737 = vmatprep.subr.mxu0 0.0
        %738 = vmatpush2.xpose.msra.mxu0 0.0
        %739 = vmatprep.subr.mxu0 0.0
        %740 = vmatpush2.xpose.msra.mxu0 0.0
        %741 = vmatprep.subr.mxu0 0.0
        %742 = vmatpush2.xpose.msra.mxu0 0.0
        %743 = vmatprep.subr.mxu0 0.0
        %744 = vmatpush2.xpose.msra.mxu0 0.0
        %745 = vmatprep.subr.mxu0 0.0
        %746 = vmatpush2.xpose.msra.mxu0 0.0
        %747 = vmatprep.subr.mxu0 0.0
        %748 = vmatpush2.xpose.msra.mxu0 0.0
        %749 = vmatprep.subr.mxu0 0.0
        %750 = vmatpush2.xpose.msra.mxu0 0.0
        %751 = vmatprep.subr.mxu0 0.0
        %752 = vmatpush2.xpose.msra.mxu0 0.0
        %753 = vmatprep.subr.mxu0 0.0
        %754 = vmatpush2.xpose.msra.mxu0 0.0
        %755 = vmatprep.subr.mxu0 0.0
        %756 = vmatpush2.xpose.msra.mxu0 0.0
        %757 = vmatprep.subr.mxu0 0.0
        %758 = vmatpush2.xpose.msra.mxu0 0.0
        %759 = vmatprep.subr.mxu0 0.0
        %760 = vmatpush2.xpose.msra.mxu0 0.0
        %v761 = vand.u32 %v693, 4294901760
        %v762 = vsub.f32 %v693, %v761
        %v763 = vand.u32 %v762, 4294901760
        %v764 = vsub.f32 %v762, %v763
        %v765 = vand.u32 %v764, 4294901760
        %766 = vmatprep.mubr.f32.mxu0 %v765
        %v767 = vand.u32 %v690, 4294901760
        %v768 = vsub.f32 %v690, %v767
        %v769 = vand.u32 %v768, 4294901760
        %v770 = vsub.f32 %v768, %v769
        %v771 = vand.u32 %v770, 4294901760
        %772 = vmatmul.mubr.f32.gmra.mxu0 %v771
        %v773 = vpop.f32.mrf.mxu0
        %v774 = vadd.f32 0.0, %v773
        %v775 = vpop.f32.mrf.mxu0
        %776 = vdwg.mxu0
        %777 = vmatprep.subr.mxu0 0.0
        %778 = vmatpush1.xpose.msra.mxu0 0.0
        %779 = vmatprep.subr.mxu0 0.0
        %780 = vmatpush1.xpose.msra.mxu0 0.0
        %781 = vmatprep.subr.mxu0 0.0
        %782 = vmatpush1.xpose.msra.mxu0 0.0
        %783 = vmatprep.subr.mxu0 0.0
        %784 = vmatpush1.xpose.msra.mxu0 0.0
        %785 = vmatprep.subr.mxu0 0.0
        %786 = vmatpush1.xpose.msra.mxu0 0.0
        %787 = vmatprep.subr.mxu0 0.0
        %788 = vmatpush1.xpose.msra.mxu0 0.0
        %789 = vmatprep.subr.mxu0 0.0
        %790 = vmatpush1.xpose.msra.mxu0 0.0
        %791 = vmatprep.subr.mxu0 0.0
        %792 = vmatpush1.xpose.msra.mxu0 0.0
        %793 = vmatprep.subr.mxu0 0.0
        %794 = vmatpush1.xpose.msra.mxu0 0.0
        %795 = vmatprep.subr.mxu0 0.0
        %796 = vmatpush1.xpose.msra.mxu0 0.0
        %797 = vmatprep.subr.mxu0 0.0
        %798 = vmatpush1.xpose.msra.mxu0 0.0
        %799 = vmatprep.subr.mxu0 0.0
        %800 = vmatpush1.xpose.msra.mxu0 0.0
        %801 = vmatprep.subr.mxu0 0.0
        %802 = vmatpush1.xpose.msra.mxu0 0.0
        %803 = vmatprep.subr.mxu0 0.0
        %804 = vmatpush1.xpose.msra.mxu0 0.0
        %805 = vmatprep.subr.mxu0 0.0
        %806 = vmatpush1.xpose.msra.mxu0 0.0
        %v807 = vand.u32 %v693, 4294901760
        %v808 = vsub.f32 %v693, %v807
        %v809 = vand.u32 %v808, 4294901760
        %v810 = vsub.f32 %v808, %v809
        %v811 = vand.u32 %v810, 4294901760
        %812 = vmatprep.subr.mxu0 %v811
        %v813 = vand.u32 %v690, 4294901760
        %v814 = vsub.f32 %v690, %v813
        %v815 = vand.u32 %v814, 4294901760
        %v816 = vsub.f32 %v814, %v815
        %v817 = vand.u32 %v816, 4294901760
        %818 = vmatpush1.xpose.msra.mxu0 %v817
        %819 = vmatprep.subr.mxu0 0.0
        %820 = vmatpush2.xpose.msra.mxu0 0.0
        %821 = vmatprep.subr.mxu0 0.0
        %822 = vmatpush2.xpose.msra.mxu0 0.0
        %823 = vmatprep.subr.mxu0 0.0
        %824 = vmatpush2.xpose.msra.mxu0 0.0
        %825 = vmatprep.subr.mxu0 0.0
        %826 = vmatpush2.xpose.msra.mxu0 0.0
        %827 = vmatprep.subr.mxu0 0.0
        %828 = vmatpush2.xpose.msra.mxu0 0.0
        %829 = vmatprep.subr.mxu0 0.0
        %830 = vmatpush2.xpose.msra.mxu0 0.0
        %831 = vmatprep.subr.mxu0 0.0
        %832 = vmatpush2.xpose.msra.mxu0 0.0
        %833 = vmatprep.subr.mxu0 0.0
        %834 = vmatpush2.xpose.msra.mxu0 0.0
        %835 = vmatprep.subr.mxu0 0.0
        %836 = vmatpush2.xpose.msra.mxu0 0.0
        %837 = vmatprep.subr.mxu0 0.0
        %838 = vmatpush2.xpose.msra.mxu0 0.0
        %839 = vmatprep.subr.mxu0 0.0
        %840 = vmatpush2.xpose.msra.mxu0 0.0
        %841 = vmatprep.subr.mxu0 0.0
        %842 = vmatpush2.xpose.msra.mxu0 0.0
        %843 = vmatprep.subr.mxu0 0.0
        %844 = vmatpush2.xpose.msra.mxu0 0.0
        %845 = vmatprep.subr.mxu0 0.0
        %846 = vmatpush2.xpose.msra.mxu0 0.0
        %847 = vmatprep.subr.mxu0 0.0
        %848 = vmatpush2.xpose.msra.mxu0 0.0
        %849 = vmatprep.subr.mxu0 0.0
        %850 = vmatpush2.xpose.msra.mxu0 0.0
        %v851 = vand.u32 %v693, 4294901760
        %852 = vmatprep.mubr.f32.mxu0 %v851
        %v853 = vand.u32 %v690, 4294901760
        %854 = vmatmul.mubr.f32.gmra.mxu0 %v853
        %v855 = vpop.f32.mrf.mxu0
        %v856 = vadd.f32 %v774, %v855
        %v857 = vpop.f32.mrf.mxu0
        %858 = vdwg.mxu0
        %859 = vmatprep.subr.mxu0 0.0
        %860 = vmatpush1.xpose.msra.mxu0 0.0
        %861 = vmatprep.subr.mxu0 0.0
        %862 = vmatpush1.xpose.msra.mxu0 0.0
        %863 = vmatprep.subr.mxu0 0.0
        %864 = vmatpush1.xpose.msra.mxu0 0.0
        %865 = vmatprep.subr.mxu0 0.0
        %866 = vmatpush1.xpose.msra.mxu0 0.0
        %867 = vmatprep.subr.mxu0 0.0
        %868 = vmatpush1.xpose.msra.mxu0 0.0
        %869 = vmatprep.subr.mxu0 0.0
        %870 = vmatpush1.xpose.msra.mxu0 0.0
        %871 = vmatprep.subr.mxu0 0.0
        %872 = vmatpush1.xpose.msra.mxu0 0.0
        %873 = vmatprep.subr.mxu0 0.0
        %874 = vmatpush1.xpose.msra.mxu0 0.0
        %875 = vmatprep.subr.mxu0 0.0
        %876 = vmatpush1.xpose.msra.mxu0 0.0
        %877 = vmatprep.subr.mxu0 0.0
        %878 = vmatpush1.xpose.msra.mxu0 0.0
        %879 = vmatprep.subr.mxu0 0.0
        %880 = vmatpush1.xpose.msra.mxu0 0.0
        %881 = vmatprep.subr.mxu0 0.0
        %882 = vmatpush1.xpose.msra.mxu0 0.0
        %883 = vmatprep.subr.mxu0 0.0
        %884 = vmatpush1.xpose.msra.mxu0 0.0
        %885 = vmatprep.subr.mxu0 0.0
        %886 = vmatpush1.xpose.msra.mxu0 0.0
        %887 = vmatprep.subr.mxu0 0.0
        %888 = vmatpush1.xpose.msra.mxu0 0.0
        %v889 = vand.u32 %v693, 4294901760
        %v890 = vsub.f32 %v693, %v889
        %891 = vmatprep.subr.mxu0 %v890
        %v892 = vand.u32 %v690, 4294901760
        %v893 = vsub.f32 %v690, %v892
        %894 = vmatpush1.xpose.msra.mxu0 %v893
        %895 = vmatprep.subr.mxu0 0.0
        %896 = vmatpush2.xpose.msra.mxu0 0.0
        %897 = vmatprep.subr.mxu0 0.0
        %898 = vmatpush2.xpose.msra.mxu0 0.0
        %899 = vmatprep.subr.mxu0 0.0
        %900 = vmatpush2.xpose.msra.mxu0 0.0
        %901 = vmatprep.subr.mxu0 0.0
        %902 = vmatpush2.xpose.msra.mxu0 0.0
        %903 = vmatprep.subr.mxu0 0.0
        %904 = vmatpush2.xpose.msra.mxu0 0.0
        %905 = vmatprep.subr.mxu0 0.0
        %906 = vmatpush2.xpose.msra.mxu0 0.0
        %907 = vmatprep.subr.mxu0 0.0
        %908 = vmatpush2.xpose.msra.mxu0 0.0
        %909 = vmatprep.subr.mxu0 0.0
        %910 = vmatpush2.xpose.msra.mxu0 0.0
        %911 = vmatprep.subr.mxu0 0.0
        %912 = vmatpush2.xpose.msra.mxu0 0.0
        %913 = vmatprep.subr.mxu0 0.0
        %914 = vmatpush2.xpose.msra.mxu0 0.0
        %915 = vmatprep.subr.mxu0 0.0
        %916 = vmatpush2.xpose.msra.mxu0 0.0
        %917 = vmatprep.subr.mxu0 0.0
        %918 = vmatpush2.xpose.msra.mxu0 0.0
        %919 = vmatprep.subr.mxu0 0.0
        %920 = vmatpush2.xpose.msra.mxu0 0.0
        %921 = vmatprep.subr.mxu0 0.0
        %922 = vmatpush2.xpose.msra.mxu0 0.0
        %923 = vmatprep.subr.mxu0 0.0
        %924 = vmatpush2.xpose.msra.mxu0 0.0
        %925 = vmatprep.subr.mxu0 0.0
        %926 = vmatpush2.xpose.msra.mxu0 0.0
        %v927 = vand.u32 %v693, 4294901760
        %v928 = vsub.f32 %v693, %v927
        %929 = vmatprep.mubr.f32.mxu0 %v928
        %v930 = vand.u32 %v690, 4294901760
        %v931 = vsub.f32 %v690, %v930
        %932 = vmatmul.mubr.f32.gmra.mxu0 %v931
        %v933 = vpop.f32.mrf.mxu0
        %v934 = vadd.f32 %v856, %v933
        %v935 = vpop.f32.mrf.mxu0
        %936 = vdwg.mxu0
        %937 = vmatprep.subr.mxu0 0.0
        %938 = vmatpush1.xpose.msra.mxu0 0.0
        %939 = vmatprep.subr.mxu0 0.0
        %940 = vmatpush1.xpose.msra.mxu0 0.0
        %941 = vmatprep.subr.mxu0 0.0
        %942 = vmatpush1.xpose.msra.mxu0 0.0
        %943 = vmatprep.subr.mxu0 0.0
        %944 = vmatpush1.xpose.msra.mxu0 0.0
        %945 = vmatprep.subr.mxu0 0.0
        %946 = vmatpush1.xpose.msra.mxu0 0.0
        %947 = vmatprep.subr.mxu0 0.0
        %948 = vmatpush1.xpose.msra.mxu0 0.0
        %949 = vmatprep.subr.mxu0 0.0
        %950 = vmatpush1.xpose.msra.mxu0 0.0
        %951 = vmatprep.subr.mxu0 0.0
        %952 = vmatpush1.xpose.msra.mxu0 0.0
        %953 = vmatprep.subr.mxu0 0.0
        %954 = vmatpush1.xpose.msra.mxu0 0.0
        %955 = vmatprep.subr.mxu0 0.0
        %956 = vmatpush1.xpose.msra.mxu0 0.0
        %957 = vmatprep.subr.mxu0 0.0
        %958 = vmatpush1.xpose.msra.mxu0 0.0
        %959 = vmatprep.subr.mxu0 0.0
        %960 = vmatpush1.xpose.msra.mxu0 0.0
        %961 = vmatprep.subr.mxu0 0.0
        %962 = vmatpush1.xpose.msra.mxu0 0.0
        %963 = vmatprep.subr.mxu0 0.0
        %964 = vmatpush1.xpose.msra.mxu0 0.0
        %965 = vmatprep.subr.mxu0 0.0
        %966 = vmatpush1.xpose.msra.mxu0 0.0
        %v967 = vand.u32 %v693, 4294901760
        %968 = vmatprep.subr.mxu0 %v967
        %v969 = vand.u32 %v690, 4294901760
        %970 = vmatpush1.xpose.msra.mxu0 %v969
        %971 = vmatprep.subr.mxu0 0.0
        %972 = vmatpush2.xpose.msra.mxu0 0.0
        %973 = vmatprep.subr.mxu0 0.0
        %974 = vmatpush2.xpose.msra.mxu0 0.0
        %975 = vmatprep.subr.mxu0 0.0
        %976 = vmatpush2.xpose.msra.mxu0 0.0
        %977 = vmatprep.subr.mxu0 0.0
        %978 = vmatpush2.xpose.msra.mxu0 0.0
        %979 = vmatprep.subr.mxu0 0.0
        %980 = vmatpush2.xpose.msra.mxu0 0.0
        %981 = vmatprep.subr.mxu0 0.0
        %982 = vmatpush2.xpose.msra.mxu0 0.0
        %983 = vmatprep.subr.mxu0 0.0
        %984 = vmatpush2.xpose.msra.mxu0 0.0
        %985 = vmatprep.subr.mxu0 0.0
        %986 = vmatpush2.xpose.msra.mxu0 0.0
        %987 = vmatprep.subr.mxu0 0.0
        %988 = vmatpush2.xpose.msra.mxu0 0.0
        %989 = vmatprep.subr.mxu0 0.0
        %990 = vmatpush2.xpose.msra.mxu0 0.0
        %991 = vmatprep.subr.mxu0 0.0
        %992 = vmatpush2.xpose.msra.mxu0 0.0
        %993 = vmatprep.subr.mxu0 0.0
        %994 = vmatpush2.xpose.msra.mxu0 0.0
        %995 = vmatprep.subr.mxu0 0.0
        %996 = vmatpush2.xpose.msra.mxu0 0.0
        %997 = vmatprep.subr.mxu0 0.0
        %998 = vmatpush2.xpose.msra.mxu0 0.0
        %999 = vmatprep.subr.mxu0 0.0
        %1000 = vmatpush2.xpose.msra.mxu0 0.0
        %1001 = vmatprep.subr.mxu0 0.0
        %1002 = vmatpush2.xpose.msra.mxu0 0.0
        %v1003 = vand.u32 %v693, 4294901760
        %v1004 = vsub.f32 %v693, %v1003
        %v1005 = vand.u32 %v1004, 4294901760
        %1006 = vmatprep.mubr.f32.mxu0 %v1005
        %v1007 = vand.u32 %v690, 4294901760
        %v1008 = vsub.f32 %v690, %v1007
        %v1009 = vand.u32 %v1008, 4294901760
        %1010 = vmatmul.mubr.f32.gmra.mxu0 %v1009
        %v1011 = vpop.f32.mrf.mxu0
        %v1012 = vadd.f32 %v934, %v1011
        %v1013 = vpop.f32.mrf.mxu0
        %1014 = vdwg.mxu0
        %1015 = vmatprep.subr.mxu0 0.0
        %1016 = vmatpush1.xpose.msra.mxu0 0.0
        %1017 = vmatprep.subr.mxu0 0.0
        %1018 = vmatpush1.xpose.msra.mxu0 0.0
        %1019 = vmatprep.subr.mxu0 0.0
        %1020 = vmatpush1.xpose.msra.mxu0 0.0
        %1021 = vmatprep.subr.mxu0 0.0
        %1022 = vmatpush1.xpose.msra.mxu0 0.0
        %1023 = vmatprep.subr.mxu0 0.0
        %1024 = vmatpush1.xpose.msra.mxu0 0.0
        %1025 = vmatprep.subr.mxu0 0.0
        %1026 = vmatpush1.xpose.msra.mxu0 0.0
        %1027 = vmatprep.subr.mxu0 0.0
        %1028 = vmatpush1.xpose.msra.mxu0 0.0
        %1029 = vmatprep.subr.mxu0 0.0
        %1030 = vmatpush1.xpose.msra.mxu0 0.0
        %1031 = vmatprep.subr.mxu0 0.0
        %1032 = vmatpush1.xpose.msra.mxu0 0.0
        %1033 = vmatprep.subr.mxu0 0.0
        %1034 = vmatpush1.xpose.msra.mxu0 0.0
        %1035 = vmatprep.subr.mxu0 0.0
        %1036 = vmatpush1.xpose.msra.mxu0 0.0
        %1037 = vmatprep.subr.mxu0 0.0
        %1038 = vmatpush1.xpose.msra.mxu0 0.0
        %1039 = vmatprep.subr.mxu0 0.0
        %1040 = vmatpush1.xpose.msra.mxu0 0.0
        %1041 = vmatprep.subr.mxu0 0.0
        %1042 = vmatpush1.xpose.msra.mxu0 0.0
        %1043 = vmatprep.subr.mxu0 0.0
        %1044 = vmatpush1.xpose.msra.mxu0 0.0
        %v1045 = vand.u32 %v693, 4294901760
        %v1046 = vsub.f32 %v693, %v1045
        %v1047 = vand.u32 %v1046, 4294901760
        %1048 = vmatprep.subr.mxu0 %v1047
        %v1049 = vand.u32 %v690, 4294901760
        %v1050 = vsub.f32 %v690, %v1049
        %v1051 = vand.u32 %v1050, 4294901760
        %1052 = vmatpush1.xpose.msra.mxu0 %v1051
        %1053 = vmatprep.subr.mxu0 0.0
        %1054 = vmatpush2.xpose.msra.mxu0 0.0
        %1055 = vmatprep.subr.mxu0 0.0
        %1056 = vmatpush2.xpose.msra.mxu0 0.0
        %1057 = vmatprep.subr.mxu0 0.0
        %1058 = vmatpush2.xpose.msra.mxu0 0.0
        %1059 = vmatprep.subr.mxu0 0.0
        %1060 = vmatpush2.xpose.msra.mxu0 0.0
        %1061 = vmatprep.subr.mxu0 0.0
        %1062 = vmatpush2.xpose.msra.mxu0 0.0
        %1063 = vmatprep.subr.mxu0 0.0
        %1064 = vmatpush2.xpose.msra.mxu0 0.0
        %1065 = vmatprep.subr.mxu0 0.0
        %1066 = vmatpush2.xpose.msra.mxu0 0.0
        %1067 = vmatprep.subr.mxu0 0.0
        %1068 = vmatpush2.xpose.msra.mxu0 0.0
        %1069 = vmatprep.subr.mxu0 0.0
        %1070 = vmatpush2.xpose.msra.mxu0 0.0
        %1071 = vmatprep.subr.mxu0 0.0
        %1072 = vmatpush2.xpose.msra.mxu0 0.0
        %1073 = vmatprep.subr.mxu0 0.0
        %1074 = vmatpush2.xpose.msra.mxu0 0.0
        %1075 = vmatprep.subr.mxu0 0.0
        %1076 = vmatpush2.xpose.msra.mxu0 0.0
        %1077 = vmatprep.subr.mxu0 0.0
        %1078 = vmatpush2.xpose.msra.mxu0 0.0
        %1079 = vmatprep.subr.mxu0 0.0
        %1080 = vmatpush2.xpose.msra.mxu0 0.0
        %1081 = vmatprep.subr.mxu0 0.0
        %1082 = vmatpush2.xpose.msra.mxu0 0.0
        %1083 = vmatprep.subr.mxu0 0.0
        %1084 = vmatpush2.xpose.msra.mxu0 0.0
        %v1085 = vand.u32 %v693, 4294901760
        %1086 = vmatprep.mubr.f32.mxu0 %v1085
        %v1087 = vand.u32 %v690, 4294901760
        %1088 = vmatmul.mubr.f32.gmra.mxu0 %v1087
        %v1089 = vpop.f32.mrf.mxu0
        %v1090 = vadd.f32 %v1012, %v1089
        %v1091 = vpop.f32.mrf.mxu0
        %1092 = vdwg.mxu0
        %1093 = vmatprep.subr.mxu0 0.0
        %1094 = vmatpush1.xpose.msra.mxu0 0.0
        %1095 = vmatprep.subr.mxu0 0.0
        %1096 = vmatpush1.xpose.msra.mxu0 0.0
        %1097 = vmatprep.subr.mxu0 0.0
        %1098 = vmatpush1.xpose.msra.mxu0 0.0
        %1099 = vmatprep.subr.mxu0 0.0
        %1100 = vmatpush1.xpose.msra.mxu0 0.0
        %1101 = vmatprep.subr.mxu0 0.0
        %1102 = vmatpush1.xpose.msra.mxu0 0.0
        %1103 = vmatprep.subr.mxu0 0.0
        %1104 = vmatpush1.xpose.msra.mxu0 0.0
        %1105 = vmatprep.subr.mxu0 0.0
        %1106 = vmatpush1.xpose.msra.mxu0 0.0
        %1107 = vmatprep.subr.mxu0 0.0
        %1108 = vmatpush1.xpose.msra.mxu0 0.0
        %1109 = vmatprep.subr.mxu0 0.0
        %1110 = vmatpush1.xpose.msra.mxu0 0.0
        %1111 = vmatprep.subr.mxu0 0.0
        %1112 = vmatpush1.xpose.msra.mxu0 0.0
        %1113 = vmatprep.subr.mxu0 0.0
        %1114 = vmatpush1.xpose.msra.mxu0 0.0
        %1115 = vmatprep.subr.mxu0 0.0
        %1116 = vmatpush1.xpose.msra.mxu0 0.0
        %1117 = vmatprep.subr.mxu0 0.0
        %1118 = vmatpush1.xpose.msra.mxu0 0.0
        %1119 = vmatprep.subr.mxu0 0.0
        %1120 = vmatpush1.xpose.msra.mxu0 0.0
        %1121 = vmatprep.subr.mxu0 0.0
        %1122 = vmatpush1.xpose.msra.mxu0 0.0
        %v1123 = vand.u32 %v693, 4294901760
        %1124 = vmatprep.subr.mxu0 %v1123
        %v1125 = vand.u32 %v690, 4294901760
        %1126 = vmatpush1.xpose.msra.mxu0 %v1125
        %1127 = vmatprep.subr.mxu0 0.0
        %1128 = vmatpush2.xpose.msra.mxu0 0.0
        %1129 = vmatprep.subr.mxu0 0.0
        %1130 = vmatpush2.xpose.msra.mxu0 0.0
        %1131 = vmatprep.subr.mxu0 0.0
        %1132 = vmatpush2.xpose.msra.mxu0 0.0
        %1133 = vmatprep.subr.mxu0 0.0
        %1134 = vmatpush2.xpose.msra.mxu0 0.0
        %1135 = vmatprep.subr.mxu0 0.0
        %1136 = vmatpush2.xpose.msra.mxu0 0.0
        %1137 = vmatprep.subr.mxu0 0.0
        %1138 = vmatpush2.xpose.msra.mxu0 0.0
        %1139 = vmatprep.subr.mxu0 0.0
        %1140 = vmatpush2.xpose.msra.mxu0 0.0
        %1141 = vmatprep.subr.mxu0 0.0
        %1142 = vmatpush2.xpose.msra.mxu0 0.0
        %1143 = vmatprep.subr.mxu0 0.0
        %1144 = vmatpush2.xpose.msra.mxu0 0.0
        %1145 = vmatprep.subr.mxu0 0.0
        %1146 = vmatpush2.xpose.msra.mxu0 0.0
        %1147 = vmatprep.subr.mxu0 0.0
        %1148 = vmatpush2.xpose.msra.mxu0 0.0
        %1149 = vmatprep.subr.mxu0 0.0
        %1150 = vmatpush2.xpose.msra.mxu0 0.0
        %1151 = vmatprep.subr.mxu0 0.0
        %1152 = vmatpush2.xpose.msra.mxu0 0.0
        %1153 = vmatprep.subr.mxu0 0.0
        %1154 = vmatpush2.xpose.msra.mxu0 0.0
        %1155 = vmatprep.subr.mxu0 0.0
        %1156 = vmatpush2.xpose.msra.mxu0 0.0
        %1157 = vmatprep.subr.mxu0 0.0
        %1158 = vmatpush2.xpose.msra.mxu0 0.0
        %v1159 = vand.u32 %v693, 4294901760
        %1160 = vmatprep.mubr.f32.mxu0 %v1159
        %v1161 = vand.u32 %v690, 4294901760
        %1162 = vmatmul.mubr.f32.gmra.mxu0 %v1161
        %v1163 = vpop.f32.mrf.mxu0
        %v1164 = vadd.f32 %v1090, %v1163
        %v1165 = vpop.f32.mrf.mxu0
        %1166 = vdwg.mxu0
        %v1167 = vadd.f32 %v691, %v1164
        %1168 = vst.msk [vmem:[%s179] sm:$0xf] %vm677, %v1167
        %v1169 = vld [vmem:[%s190] sm:$0xf]
        %v1170 = vsel %vm680, %v690, 0.0
        %v1171 = vsel %vm680, %v693, 0.0
        %v1172 = vadd.f32 %v1170, %v1171
        %1173 = vadd.xlane.f32.xlu0 %v1172
        %v1174 = vpop.xlane.xlu0 %1173
        %v1175 = vadd.f32 %v1169, %v1174
        %1176 = vst.msk [vmem:[%s190] sm:$0xf] %vm687, %v1175
        %s1177 = sand.u32 %s68, 1
        %s1178 = scalar_lea.sflag [#allocation4], %s1177
        %s1179 = sand.u32 %s68, 1
        %s1180 = smul.addr %s1179, 4
        %s1181 = scalar_lea.vmem [#allocation5], %s1180
        %p1182 = scmp.lt.s32.totalorder %s24, 2
        %s1183 = scalar_select %p1182, %s24, 2
        %s1184 = smul.addr %s1183, 4
        %s1185 = scalar_lea.vmem %s2, %s1184
        // Predicated region
        $region33: #{tpu_custom_call.1} parent=23 // pred_check
          %p1186 = pneg %p78
        $region34: #{tpu_custom_call.1} parent=23 // pred_check_branch
          %1188 = sbr.rel (%p1186) target = $region36
        $region35: #{tpu_custom_call.1} parent=23 // pred_region
          %s1190 = ssub.s32 64, 64
          %1191 = vsyncadd %s1178, %s1190
          %s1192 = smul.addr %s24, 64
          %s1193 = scalar_lea.hbm %s1, %s1192
          %s1195 = sshll.u32 %s1181, 4
          %s1196 = int_to_ptr.vmem [resolvable:$true] %s1195
          %1198 = dma.vmem_to_hbm [thread:$0]  %s1196, 64, %s1193, %s1178
        $region36: #{tpu_custom_call.1} parent=23 // pred_fallthru
          _
        // Predicated region
        $region37: #{tpu_custom_call.1} parent=23 // pred_check
          %p1199 = pneg %p104
        $region38: #{tpu_custom_call.1} parent=23 // pred_check_branch
          %1201 = sbr.rel (%p1199) target = $region40
        $region39: #{tpu_custom_call.1} parent=23 // pred_region
          _
        $region40: #{tpu_custom_call.1} parent=23 // pred_fallthru
          _
      $region24: #{tpu_custom_call.1} parent=5 // pred_fallthru
        _
      %p1202 = scmp.le.s32.totalorder 2, %s15
      // Predicated region
      $region41: #{tpu_custom_call.1} parent=5 // pred_check
        %p1203 = pneg %p1202
      $region42: #{tpu_custom_call.1} parent=5 // pred_check_branch
        %1205 = sbr.rel (%p1203) target = $region44
      $region43: #{tpu_custom_call.1} parent=5 // pred_region
        %s1206 = ssub.s32 %s15, 2
        // Predicated region
        $region45: #{tpu_custom_call.1} parent=43 // pred_check
          %p1207 = pneg %p84
        $region46: #{tpu_custom_call.1} parent=43 // pred_check_branch
          %1209 = sbr.rel (%p1207) target = $region48
        $region47: #{tpu_custom_call.1} parent=43 // pred_region
          %s1210 = sand.u32 %s69, 1
          %s1211 = scalar_lea.sflag [#allocation4], %s1210
          %s1212 = sand.u32 %s69, 1
          %s1213 = smul.addr %s1212, 4
          %s1214 = scalar_lea.vmem [#allocation5], %s1213
          %1215 = dma.done %s1211, 64
        $region48: #{tpu_custom_call.1} parent=43 // pred_fallthru
          _
        // Predicated region
        $region49: #{tpu_custom_call.1} parent=43 // pred_check
          %p1216 = pneg %p110
        $region50: #{tpu_custom_call.1} parent=43 // pred_check_branch
          %1218 = sbr.rel (%p1216) target = $region52
        $region51: #{tpu_custom_call.1} parent=43 // pred_region
          %p1219 = scmp.lt.s32.totalorder %s26, 2
          %s1220 = scalar_select %p1219, %s26, 2
          %s1221 = smul.addr %s1220, 4
          %s1222 = scalar_lea.vmem %s2, %s1221
        $region52: #{tpu_custom_call.1} parent=43 // pred_fallthru
          _
      $region44: #{tpu_custom_call.1} parent=5 // pred_fallthru
        _
    $region6: #{tpu_custom_call.1} parent=1 // loop_footer
      %s19 = sadd.s32 1, %s15
    $region7: #{tpu_custom_call.1} parent=1 // loop_footer_branch
      %14 = sbr.rel target = $region3
    $region8: #{tpu_custom_call.1} parent=1 // loop_exit
      _
    %1223 = vsyncpa [#allocation3], 1
    %s1224 = scalar_lea.sflag [#allocation3], 1
    %1225 = vsyncpa %s1224, 1
    %1226 = vsyncpa [#allocation4], 1
    %s1227 = scalar_lea.sflag [#allocation4], 1
    %1228 = vsyncpa %s1227, 1

</llo_original>
